<compile_context>
chip_gen: v5e
topology: v5e:2x2
jax: 0.10.0
libtpu: 0.0.40
codegen_flags: <defaults>
</compile_context>

<pallas_src>
import numpy as np
import jax
import jax.numpy as jnp
from jax.experimental import pallas as pl
from jax.experimental.pallas import tpu as pltpu

ALPHA = 0.25
GAMMA = 2.0
EPS = 1e-8


def _fast_recip(x):
    # approx EUP reciprocal + one Newton step -> ~f32 accuracy without a full divide
    r = pl.reciprocal(x, approx=True)
    return r * (2.0 - x * r)


def _hw_params():
    """(num_tensorcores, scoped-VMEM cap in bytes) from the device kind; safe fallbacks."""
    kind = ""
    try:
        kind = jax.devices()[0].device_kind.lower()
    except Exception:
        pass
    is_v7 = ("v7" in kind) or ("tpu7" in kind)
    two_core = is_v7 or ("v4" in kind) or ("v5p" in kind)
    num_cores = 2 if two_core else 1
    # v7x: 64 MiB physical VMEM -> cap 56 MiB. v4/v5e/v5p/v6e: 128 MiB -> cap 96 MiB.
    # Unknown device -> conservative 56 MiB (safe on every generation).
    vmem_cap = (56 << 20) if (is_v7 or kind == "") else (96 << 20)
    return num_cores, vmem_cap


def _plan_tiles(N, bs, num_cores, vmem_cap, C, M, apply_rect):
    """Largest 128-aligned N-tile that keeps >= 2*num_cores grid points and fits VMEM."""
    # conservative f32 bytes per lane column: double-buffered in/out blocks + temporaries
    per_col = 4 * (2 * (C + 7 + (1 if apply_rect else 0) + M) + 4 * C + 6 * M + 16)
    max_tile = max(128, ((vmem_cap // 2) // per_col) // 128 * 128)
    max_tile = min(max_tile, 32768)

    tiles_wanted = max(1, -(-(2 * num_cores) // max(bs, 1)))    # ceil(2*cores / bs)
    tile_n = -(-N // tiles_wanted)                              # ceil(N / tiles_wanted)
    tile_n = -(-tile_n // 128) * 128                            # round up to lane multiple
    tile_n = max(128, min(tile_n, max_tile))
    n_tiles = -(-N // tile_n)
    return tile_n, n_tiles, n_tiles * tile_n


def _make_cost_kernel(apply_rect, rect_items, weights):
    w_class, w_bbox, w_giou, w_rad = (float(w) for w in weights)

    def kernel(logits_ref, *rest):
        if apply_rect:
            piou_ref, oboxT_ref, tbox_ref, onehot_ref, cost_ref = rest
        else:
            oboxT_ref, tbox_ref, onehot_ref, cost_ref = rest

        logits = logits_ref[0].astype(jnp.float32)             # (C, Nt)  queries on lanes
        prob = jax.nn.sigmoid(logits)                           # out_prob
        C, Nt = prob.shape

        if apply_rect:
            # TODO(synk): torch would NaN for pred_iou < -1 (negative pow base); clamp at 0
            # instead so degenerate logits stay finite for the host solver.
            out_iou = jnp.maximum((piou_ref[0].astype(jnp.float32) + 1.0) * 0.5, 0.0)  # (1, Nt)
            cls_idx = jax.lax.broadcasted_iota(jnp.int32, (C, 1), 0)
            r = jnp.zeros((C, 1), jnp.float32)
            mask = jnp.zeros((C, 1), jnp.bool_)
            for i, ri in rect_items:
                r = jnp.where(cls_idx == i, jnp.float32(ri), r)
                mask = jnp.logical_or(mask, cls_idx == i)
            # fused rectifier: prob^(1-r) * iou^r == exp((1-r)*log(prob) + r*log(iou))
            rect_prob = jnp.exp((1.0 - r) * jnp.log(prob) + r * jnp.log(out_iou))
            prob = jnp.where(mask, rect_prob, prob)

        # focal-style class cost (pos - neg); GAMMA == 2 -> plain squares on the VALU
        one_m = 1.0 - prob
        neg = (1.0 - ALPHA) * (prob * prob) * (-jnp.log(one_m + EPS))
        pos = ALPHA * (one_m * one_m) * (-jnp.log(prob + EPS))
        diff = pos - neg                                              # (C, Nt)

        onehot = onehot_ref[0].astype(jnp.float32)                    # (M, C)
        M = onehot.shape[0]
        if C <= 16:
            # exact VPU "gather": avoids the MXU multi-pass + MRF-drain latency for tiny C
            cost_class = jnp.zeros((M, Nt), jnp.float32)
            for c in range(C):
                cost_class = cost_class + onehot[:, c:c + 1] * diff[c:c + 1, :]
        else:
            # keep HIGHEST: DEFAULT would truncate the f32 operand to bf16 in the MXU
            cost_class = jnp.dot(onehot, diff,
                                 preferred_element_type=jnp.float32,
                                 precision=jax.lax.Precision.HIGHEST)

        obox = oboxT_ref[0].astype(jnp.float32)                       # (7, Nt)
        tbox = tbox_ref[0].astype(jnp.float32)                        # (M, 7)

        # L1 cdist over the 6 geometric dims + rad (targets on sublanes, preds on lanes)
        cost_bbox = jnp.zeros((M, Nt), jnp.float32)
        for d in range(6):
            cost_bbox = cost_bbox + jnp.abs(tbox[:, d:d + 1] - obox[d:d + 1, :])
        cost_rad = jnp.abs(tbox[:, 6:7] - obox[6:7, :])

        # corners (cx,cy,cz,l,w,h) -> (min, max), sanitized once
        omin = jnp.nan_to_num(obox[0:3, :] - 0.5 * obox[3:6, :])      # (3, Nt)
        omax = jnp.nan_to_num(obox[0:3, :] + 0.5 * obox[3:6, :])      # (3, Nt)
        tmin = jnp.nan_to_num(tbox[:, 0:3] - 0.5 * tbox[:, 3:6])      # (M, 3)
        tmax = jnp.nan_to_num(tbox[:, 0:3] + 0.5 * tbox[:, 3:6])      # (M, 3)

        # generalized 3D IoU (axis-aligned, no rotation)
        inter = jnp.ones((M, Nt), jnp.float32)
        enc = jnp.ones((M, Nt), jnp.float32)
        vol1 = jnp.ones((1, Nt), jnp.float32)
        vol2 = jnp.ones((M, 1), jnp.float32)
        for d in range(3):
            mn1 = omin[d:d + 1, :]
            mx1 = omax[d:d + 1, :]
            mn2 = tmin[:, d:d + 1]
            mx2 = tmax[:, d:d + 1]
            inter = inter * jnp.maximum(jnp.minimum(mx1, mx2) - jnp.maximum(mn1, mn2), 0.0)
            enc = enc * jnp.maximum(jnp.maximum(mx1, mx2) - jnp.minimum(mn1, mn2), 0.0)
            vol1 = vol1 * (mx1 - mn1)
            vol2 = vol2 * (mx2 - mn2)
        union = vol1 + vol2 - inter                                   # (M, Nt)
        # giou = inter/union - 1 + union/enc; tiny clamps keep degenerate (zero-volume)
        # boxes (incl. zero-padded queries) finite for the host Hungarian solver.
        inv_union = _fast_recip(jnp.maximum(union, 1e-12))
        inv_enc = _fast_recip(jnp.maximum(enc, 1e-12))
        giou = inter * inv_union - 1.0 + union * inv_enc
        cost_giou = -giou

        cost_ref[0] = (w_bbox * cost_bbox + w_class * cost_class
                       + w_giou * cost_giou + w_rad * cost_rad)

    return kernel


def compute_cost_matrices(pred_logitsT, pred_iousT, pred_boxesT, tgt_boxes, tgt_onehot,
                          rect_items, weights):
    """Returns the cost matrix TRANSPOSED and N-padded: (B, M, N_pad), lane-dense in N."""
    bs, C, N = pred_logitsT.shape
    M = tgt_onehot.shape[1]
    apply_rect = (pred_iousT is not None) and (len(rect_items) > 0)

    num_cores, vmem_cap = _hw_params()
    tile_n, n_tiles, n_pad = _plan_tiles(N, bs, num_cores, vmem_cap, C, M, apply_rect)

    if n_pad != N:
        # zero-pad queries (finite costs by construction); dropped before the host solve
        padw = ((0, 0), (0, 0), (0, n_pad - N))
        pred_logitsT = jnp.pad(pred_logitsT, padw)
        pred_boxesT = jnp.pad(pred_boxesT, padw)
        if apply_rect:
            pred_iousT = jnp.pad(pred_iousT, padw)

    kernel = _make_cost_kernel(apply_rect, rect_items, weights)

    in_specs = [pl.BlockSpec((1, C, tile_n), lambda b, n: (b, 0, n))]
    inputs = [pred_logitsT]
    if apply_rect:
        in_specs.append(pl.BlockSpec((1, 1, tile_n), lambda b, n: (b, 0, n)))
        inputs.append(pred_iousT)
    in_specs += [
        pl.BlockSpec((1, 7, tile_n), lambda b, n: (b, 0, n)),
        pl.BlockSpec((1, M, 7), lambda b, n: (b, 0, 0)),   # constant across N tiles (no re-DMA)
        pl.BlockSpec((1, M, C), lambda b, n: (b, 0, 0)),
    ]
    inputs += [pred_boxesT, tgt_boxes, tgt_onehot]

    return pl.pallas_call(
        kernel,
        out_shape=jax.ShapeDtypeStruct((bs, M, n_pad), jnp.float32),
        grid=(bs, n_tiles),                       # batch outer, N-tile inner
        in_specs=in_specs,
        out_specs=pl.BlockSpec((1, M, tile_n), lambda b, n: (b, 0, n)),
        compiler_params=pltpu.CompilerParams(
            dimension_semantics=("parallel", "parallel"),
            vmem_limit_bytes=int(vmem_cap)),
    )(*inputs)


def linear_sum_assignment_np(cost):
    """Pure-numpy Hungarian (Jonker-Volgenant potentials), same result as scipy."""
    cost = np.asarray(cost, dtype=np.float64)
    transposed = False
    if cost.shape[0] > cost.shape[1]:
        cost = cost.T
        transposed = True
    n, m = cost.shape
    INF = float("inf")
    u = np.zeros(n + 1)
    v = np.zeros(m + 1)
    p = np.zeros(m + 1, dtype=np.int64)
    way = np.zeros(m + 1, dtype=np.int64)
    for i in range(1, n + 1):
        p[0] = i
        j0 = 0
        minv = np.full(m + 1, INF)
        used = np.zeros(m + 1, dtype=bool)
        while True:
            used[j0] = True
            i0 = p[j0]
            delta = INF
            j1 = 0
            for j in range(1, m + 1):
                if not used[j]:
                    cur = cost[i0 - 1, j - 1] - u[i0] - v[j]
                    if cur < minv[j]:
                        minv[j] = cur
                        way[j] = j0
                    if minv[j] < delta:
                        delta = minv[j]
                        j1 = j
            for j in range(m + 1):
                if used[j]:
                    u[p[j]] += delta
                    v[j] -= delta
                else:
                    minv[j] -= delta
            j0 = j1
            if p[j0] == 0:
                break
        while True:
            j1 = way[j0]
            p[j0] = p[j1]
            j0 = j1
            if j0 == 0:
                break
    rows, cols = [], []
    for j in range(1, m + 1):
        if p[j] != 0:
            rows.append(p[j] - 1)
            cols.append(j - 1)
    rows = np.array(rows, dtype=np.int64)
    cols = np.array(cols, dtype=np.int64)
    if transposed:
        rows, cols = cols, rows
    order = np.argsort(rows)
    return rows[order], cols[order]


class HungarianMatcher3dPallas:
    def __init__(self, cost_class=1.0, cost_bbox=1.0, cost_giou=1.0, cost_rad=1.0,
                 decode_bbox_func=None, iou_rectifier=(0.68, 0.71, 0.65), iou_cls=(0, 1, 2)):
        assert cost_class != 0 or cost_bbox != 0 or cost_giou != 0 or cost_rad != 0
        self.cost_class = cost_class
        self.cost_bbox = cost_bbox
        self.cost_giou = cost_giou
        self.cost_rad = cost_rad
        self.decode_bbox_func = decode_bbox_func
        self.iou_rectifier = iou_rectifier
        self.iou_cls = tuple(iou_cls)
        self.last_cost_T = None          # (B, M, N_pad) lane-dense cost from the kernel
        self.last_num_queries = 0

    def __call__(self, outputs, targets):
        pred_logits = outputs["pred_logits"]
        pred_boxes = outputs["pred_boxes"]
        has_iou = "pred_ious" in outputs
        pred_ious = outputs["pred_ious"] if has_iou else None

        if "topk_indexes" in outputs:
            idx = outputs["topk_indexes"]
            pred_logits = jnp.take_along_axis(
                pred_logits, jnp.broadcast_to(idx, idx.shape[:2] + (pred_logits.shape[-1],)), axis=1)
            pred_boxes = jnp.take_along_axis(
                pred_boxes, jnp.broadcast_to(idx, idx.shape[:2] + (pred_boxes.shape[-1],)), axis=1)
            if has_iou:
                pred_ious = jnp.take_along_axis(
                    pred_ious, jnp.broadcast_to(idx, idx.shape[:2] + (pred_ious.shape[-1],)), axis=1)

        bs, num_queries, C = pred_logits.shape

        rect = self.iou_rectifier
        if isinstance(rect, float):
            rect = [rect] * C
        rect = list(rect)
        rect_items = ([(i, float(rect[i])) for i in range(min(len(rect), C)) if i in self.iou_cls]
                      if has_iou else [])

        # TODO(synk): variable-length target lists per batch element are stacked
        # here only if they all have the same length (synthetic setup).
        tgt_labels = jnp.stack([jnp.asarray(t["labels"]) for t in targets])                        # (B, M)
        tgt_boxes = jnp.stack([jnp.asarray(t["gt_boxes"])[..., :7] for t in targets]).astype(jnp.float32)  # (B, M, 7)
        onehot = jax.nn.one_hot(tgt_labels, C, dtype=jnp.float32)                                  # (B, M, C)

        # feed predictions transposed (queries on lanes) in their NATIVE dtype;
        # the kernel upcasts to f32 internally (halves HBM/DMA bytes for bf16 preds)
        logitsT = jnp.transpose(pred_logits, (0, 2, 1))                                            # (B, C, N)
        boxesT = jnp.transpose(pred_boxes[..., :7], (0, 2, 1))                                     # (B, 7, N)
        iousT = (jnp.transpose(pred_ious, (0, 2, 1))
                 if (has_iou and len(rect_items) > 0) else None)                                   # (B, 1, N)

        costT = compute_cost_matrices(
            logitsT, iousT, boxesT, tgt_boxes, onehot, rect_items,
            (self.cost_class, self.cost_bbox, self.cost_giou, self.cost_rad))
        self.last_cost_T = costT
        self.last_num_queries = num_queries

        # no device-side transpose: pull (B, M, N_pad) to host, view-transpose, drop padding
        cost_np = np.asarray(jax.device_get(costT))

        # TODO(synk): the Hungarian assignment is sequential/combinatorial; no Pallas equivalent.
        indices = []
        for b in range(bs):
            i, j = linear_sum_assignment_np(cost_np[b, :, :num_queries].T)
            indices.append((i.astype(np.int64), j.astype(np.int64)))
        return indices


# ---------------- numpy reference (mirrors the torch code) ----------------
def _np_xyxyxy(b):
    c, s = b[:, :3], b[:, 3:6]
    return np.concatenate([c - 0.5 * s, c + 0.5 * s], axis=-1)


def _np_giou(b1, b2):
    b1 = np.nan_to_num(b1)
    b2 = np.nan_to_num(b2)
    vol1 = np.prod(b1[:, 3:] - b1[:, :3], axis=-1)
    vol2 = np.prod(b2[:, 3:] - b2[:, :3], axis=-1)
    lt = np.maximum(b1[:, None, :3], b2[None, :, :3])
    rb = np.minimum(b1[:, None, 3:], b2[None, :, 3:])
    inter = np.prod(np.clip(rb - lt, 0, None), axis=-1)
    union = vol1[:, None] + vol2[None, :] - inter
    iou = inter / union
    lt2 = np.minimum(b1[:, None, :3], b2[None, :, :3])
    rb2 = np.maximum(b1[:, None, 3:], b2[None, :, 3:])
    vol = np.prod(np.clip(rb2 - lt2, 0, None), axis=-1)
    return iou - (vol - union) / vol


def _np_reference_cost(logits, piou, boxes, tgt_boxes, tgt_labels, rect, iou_cls, w):
    w_class, w_bbox, w_giou, w_rad = w
    prob = 1.0 / (1.0 + np.exp(-logits.astype(np.float64)))
    if piou is not None:
        out_iou = (piou.astype(np.float64) + 1.0) / 2.0
        for i in range(len(rect)):
            if i not in iou_cls or i >= prob.shape[-1]:
                continue
            prob[:, i] = prob[:, i] ** (1.0 - rect[i]) * out_iou[:, 0] ** rect[i]
    neg = (1 - ALPHA) * prob ** GAMMA * -np.log(1 - prob + EPS)
    pos = ALPHA * (1 - prob) ** GAMMA * -np.log(prob + EPS)
    cost_class = (pos - neg)[:, tgt_labels]
    ob, tb = boxes[:, :6].astype(np.float64), tgt_boxes[:, :6].astype(np.float64)
    cost_bbox = np.abs(ob[:, None, :] - tb[None, :, :]).sum(-1)
    cost_rad = np.abs(boxes[:, 6:7].astype(np.float64)[:, None, :]
                      - tgt_boxes[:, 6:7].astype(np.float64)[None, :, :]).sum(-1)
    cost_giou = -_np_giou(_np_xyxyxy(ob), _np_xyxyxy(tb))
    return w_bbox * cost_bbox + w_class * cost_class + w_giou * cost_giou + w_rad * cost_rad


if __name__ == "__main__":
    key = jax.random.PRNGKey(0)

    def make_inputs(k, bs, N, C, M, with_iou):
        ks = jax.random.split(k, 9)
        pred_logits = jax.random.normal(ks[0], (bs, N, C), jnp.float32)
        pred_ious = (jnp.tanh(jax.random.normal(ks[1], (bs, N, 1), jnp.float32))
                     if with_iou else None)                                         # in (-1, 1)
        pc = jax.random.uniform(ks[2], (bs, N, 3), minval=-10.0, maxval=10.0)
        ps = jax.random.uniform(ks[3], (bs, N, 3), minval=0.5, maxval=4.0)
        pr = jax.random.uniform(ks[4], (bs, N, 1), minval=-3.14, maxval=3.14)
        pred_boxes = jnp.concatenate([pc, ps, pr], axis=-1)                         # (B, N, 7)
        tc = jax.random.uniform(ks[5], (bs, M, 3), minval=-10.0, maxval=10.0)
        ts = jax.random.uniform(ks[6], (bs, M, 3), minval=0.5, maxval=4.0)
        tr = jax.random.uniform(ks[7], (bs, M, 1), minval=-3.14, maxval=3.14)
        tgt_boxes = jnp.concatenate([tc, ts, tr], axis=-1)                          # (B, M, 7)
        tgt_labels = jax.random.randint(ks[8], (bs, M), 0, C)
        return pred_logits, pred_ious, pred_boxes, tgt_boxes, tgt_labels

    k1, k2 = jax.random.split(key)
    matcher = HungarianMatcher3dPallas(cost_class=1.0, cost_bbox=1.0,
                                       cost_giou=1.0, cost_rad=1.0)

    # --- test 1: iou-rectified path, N already a 128 multiple ---
    bs, N, C, M = 2, 128, 3, 8
    pred_logits, pred_ious, pred_boxes, tgt_boxes, tgt_labels = make_inputs(k1, bs, N, C, M, True)
    outputs = {"pred_logits": pred_logits, "pred_boxes": pred_boxes, "pred_ious": pred_ious}
    targets = [{"labels": tgt_labels[b], "gt_boxes": tgt_boxes[b]} for b in range(bs)]
    indices = matcher(outputs, targets)
    jax.block_until_ready(matcher.last_cost_T)
    costT_np = np.asarray(jax.device_get(matcher.last_cost_T))          # (B, M, N_pad)
    for b in range(bs):
        ref = _np_reference_cost(
            np.asarray(pred_logits[b]), np.asarray(pred_ious[b]), np.asarray(pred_boxes[b]),
            np.asarray(tgt_boxes[b]), np.asarray(tgt_labels[b]),
            [0.68, 0.71, 0.65], (0, 1, 2), (1.0, 1.0, 1.0, 1.0))
        np.testing.assert_allclose(costT_np[b, :, :N].T, ref, rtol=1e-3, atol=1e-2)
        assert len(indices[b][0]) == min(N, M)

    # --- test 2: no pred_ious, N not a 128 multiple (exercises the padding path) ---
    bs2, N2, C2, M2 = 2, 200, 3, 8
    pred_logits2, _, pred_boxes2, tgt_boxes2, tgt_labels2 = make_inputs(k2, bs2, N2, C2, M2, False)
    outputs2 = {"pred_logits": pred_logits2, "pred_boxes": pred_boxes2}
    targets2 = [{"labels": tgt_labels2[b], "gt_boxes": tgt_boxes2[b]} for b in range(bs2)]
    indices2 = matcher(outputs2, targets2)
    jax.block_until_ready(matcher.last_cost_T)
    costT2_np = np.asarray(jax.device_get(matcher.last_cost_T))          # (B, M, N_pad >= 200)
    assert costT2_np.shape[2] >= N2 and np.isfinite(costT2_np).all()
    for b in range(bs2):
        ref2 = _np_reference_cost(
            np.asarray(pred_logits2[b]), None, np.asarray(pred_boxes2[b]),
            np.asarray(tgt_boxes2[b]), np.asarray(tgt_labels2[b]),
            [0.68, 0.71, 0.65], (0, 1, 2), (1.0, 1.0, 1.0, 1.0))
        np.testing.assert_allclose(costT2_np[b, :, :N2].T, ref2, rtol=1e-3, atol=1e-2)
        assert len(indices2[b][0]) == min(N2, M2)

    print("KERNEL_OK")
</pallas_src>

<mosaic_0001>
module attributes {stable_mosaic.version = 11 : i64} {
  func.func @kernel(%arg0: i32, %arg1: i32, %arg2: memref<1x3x128xf32, #tpu.memory_space<vmem>>, %arg3: memref<1x1x128xf32, #tpu.memory_space<vmem>>, %arg4: memref<1x7x128xf32, #tpu.memory_space<vmem>>, %arg5: memref<1x8x7xf32, #tpu.memory_space<vmem>>, %arg6: memref<1x8x3xf32, #tpu.memory_space<vmem>>, %arg7: memref<1x8x128xf32, #tpu.memory_space<vmem>>) attributes {dimension_semantics = [#tpu.dimension_semantics<parallel>, #tpu.dimension_semantics<parallel>], iteration_bounds = array<i64: 2, 1>, scalar_prefetch = 0 : i64, scratch_operands = 0 : i64, tpu.core_type = #tpu.core_type<tc>, window_params = [{transform_indices = @transform_0, window_bounds = array<i64: 1, 3, 128>}, {transform_indices = @transform_1, window_bounds = array<i64: 1, 1, 128>}, {transform_indices = @transform_2, window_bounds = array<i64: 1, 7, 128>}, {transform_indices = @transform_3, window_bounds = array<i64: 1, 8, 7>}, {transform_indices = @transform_4, window_bounds = array<i64: 1, 8, 3>}, {transform_indices = @transform_5, window_bounds = array<i64: 1, 8, 128>}]} {
    %c0 = arith.constant 0 : index
    %c0_0 = arith.constant 0 : index
    %c0_1 = arith.constant 0 : index
    %0 = vector.load %arg2[%c0, %c0_0, %c0_1] : memref<1x3x128xf32, #tpu.memory_space<vmem>>, vector<1x3x128xf32>
    %1 = vector.shape_cast %0 : vector<1x3x128xf32> to vector<3x128xf32>
    %2 = arith.negf %1 : vector<3x128xf32>
    %3 = math.exp %2 : vector<3x128xf32>
    %cst = arith.constant 1.000000e+00 : f32
    %4 = vector.broadcast %cst : f32 to vector<3x128xf32>
    %5 = arith.addf %4, %3 : vector<3x128xf32>
    %6 = arith.divf %4, %5 : vector<3x128xf32>
    %c0_2 = arith.constant 0 : index
    %c0_3 = arith.constant 0 : index
    %c0_4 = arith.constant 0 : index
    %7 = vector.load %arg3[%c0_2, %c0_3, %c0_4] : memref<1x1x128xf32, #tpu.memory_space<vmem>>, vector<1x1x128xf32>
    %8 = vector.shape_cast %7 : vector<1x1x128xf32> to vector<1x128xf32>
    %cst_5 = arith.constant 1.000000e+00 : f32
    %9 = vector.broadcast %cst_5 : f32 to vector<1x128xf32>
    %10 = arith.addf %8, %9 : vector<1x128xf32>
    %cst_6 = arith.constant 5.000000e-01 : f32
    %11 = vector.broadcast %cst_6 : f32 to vector<1x128xf32>
    %12 = arith.mulf %10, %11 : vector<1x128xf32>
    %cst_7 = arith.constant 0.000000e+00 : f32
    %13 = vector.broadcast %cst_7 : f32 to vector<1x128xf32>
    %14 = arith.maximumf %12, %13 : vector<1x128xf32>
    %15 = tpu.iota {dimensions = array<i32: 0>} : vector<3x1xi32>
    %cst_8 = arith.constant 0.000000e+00 : f32
    %16 = vector.broadcast %cst_8 : f32 to vector<3x1xf32>
    %false = arith.constant false
    %17 = vector.broadcast %false : i1 to vector<3x1xi1>
    %c0_i32 = arith.constant 0 : i32
    %18 = vector.broadcast %c0_i32 : i32 to vector<3x1xi32>
    %19 = arith.cmpi eq, %15, %18 : vector<3x1xi32>
    %cst_9 = arith.constant 6.800000e-01 : f32
    %20 = vector.broadcast %cst_9 : f32 to vector<3x1xf32>
    %21 = arith.select %19, %20, %16 : vector<3x1xi1>, vector<3x1xf32>
    %c0_i32_10 = arith.constant 0 : i32
    %22 = vector.broadcast %c0_i32_10 : i32 to vector<3x1xi32>
    %23 = arith.cmpi eq, %15, %22 : vector<3x1xi32>
    %24 = arith.ori %17, %23 : vector<3x1xi1>
    %c1_i32 = arith.constant 1 : i32
    %25 = vector.broadcast %c1_i32 : i32 to vector<3x1xi32>
    %26 = arith.cmpi eq, %15, %25 : vector<3x1xi32>
    %cst_11 = arith.constant 0.709999978 : f32
    %27 = vector.broadcast %cst_11 : f32 to vector<3x1xf32>
    %28 = arith.select %26, %27, %21 : vector<3x1xi1>, vector<3x1xf32>
    %c1_i32_12 = arith.constant 1 : i32
    %29 = vector.broadcast %c1_i32_12 : i32 to vector<3x1xi32>
    %30 = arith.cmpi eq, %15, %29 : vector<3x1xi32>
    %31 = arith.ori %24, %30 : vector<3x1xi1>
    %c2_i32 = arith.constant 2 : i32
    %32 = vector.broadcast %c2_i32 : i32 to vector<3x1xi32>
    %33 = arith.cmpi eq, %15, %32 : vector<3x1xi32>
    %cst_13 = arith.constant 6.500000e-01 : f32
    %34 = vector.broadcast %cst_13 : f32 to vector<3x1xf32>
    %35 = arith.select %33, %34, %28 : vector<3x1xi1>, vector<3x1xf32>
    %c2_i32_14 = arith.constant 2 : i32
    %36 = vector.broadcast %c2_i32_14 : i32 to vector<3x1xi32>
    %37 = arith.cmpi eq, %15, %36 : vector<3x1xi32>
    %38 = arith.ori %31, %37 : vector<3x1xi1>
    %cst_15 = arith.constant 1.000000e+00 : f32
    %39 = vector.broadcast %cst_15 : f32 to vector<3x1xf32>
    %40 = arith.subf %39, %35 : vector<3x1xf32>
    %41 = math.log %6 : vector<3x128xf32>
    %42 = vector.broadcast %40 : vector<3x1xf32> to vector<3x128xf32>
    %43 = arith.mulf %42, %41 : vector<3x128xf32>
    %44 = math.log %14 : vector<1x128xf32>
    %45 = vector.broadcast %35 : vector<3x1xf32> to vector<3x128xf32>
    %46 = vector.broadcast %44 : vector<1x128xf32> to vector<3x128xf32>
    %47 = arith.mulf %45, %46 : vector<3x128xf32>
    %48 = arith.addf %43, %47 : vector<3x128xf32>
    %49 = math.exp %48 : vector<3x128xf32>
    %50 = vector.shape_cast %38 : vector<3x1xi1> to vector<3x1xi1>
    %51 = vector.broadcast %50 : vector<3x1xi1> to vector<3x128xi1>
    %52 = arith.select %51, %49, %6 : vector<3x128xi1>, vector<3x128xf32>
    %cst_16 = arith.constant 1.000000e+00 : f32
    %53 = vector.broadcast %cst_16 : f32 to vector<3x128xf32>
    %54 = arith.subf %53, %52 : vector<3x128xf32>
    %55 = arith.mulf %52, %52 : vector<3x128xf32>
    %cst_17 = arith.constant 7.500000e-01 : f32
    %56 = vector.broadcast %cst_17 : f32 to vector<3x128xf32>
    %57 = arith.mulf %56, %55 : vector<3x128xf32>
    %cst_18 = arith.constant 9.99999993E-9 : f32
    %58 = vector.broadcast %cst_18 : f32 to vector<3x128xf32>
    %59 = arith.addf %54, %58 : vector<3x128xf32>
    %60 = math.log %59 : vector<3x128xf32>
    %cst_19 = arith.constant 0.000000e+00 : f32
    %61 = vector.broadcast %cst_19 : f32 to vector<3x128xf32>
    %62 = arith.subf %61, %60 : vector<3x128xf32>
    %63 = arith.mulf %57, %62 : vector<3x128xf32>
    %64 = arith.mulf %54, %54 : vector<3x128xf32>
    %cst_20 = arith.constant 2.500000e-01 : f32
    %65 = vector.broadcast %cst_20 : f32 to vector<3x128xf32>
    %66 = arith.mulf %65, %64 : vector<3x128xf32>
    %cst_21 = arith.constant 9.99999993E-9 : f32
    %67 = vector.broadcast %cst_21 : f32 to vector<3x128xf32>
    %68 = arith.addf %52, %67 : vector<3x128xf32>
    %69 = math.log %68 : vector<3x128xf32>
    %cst_22 = arith.constant 0.000000e+00 : f32
    %70 = vector.broadcast %cst_22 : f32 to vector<3x128xf32>
    %71 = arith.subf %70, %69 : vector<3x128xf32>
    %72 = arith.mulf %66, %71 : vector<3x128xf32>
    %73 = arith.subf %72, %63 : vector<3x128xf32>
    %c0_23 = arith.constant 0 : index
    %c0_24 = arith.constant 0 : index
    %c0_25 = arith.constant 0 : index
    %74 = vector.load %arg6[%c0_23, %c0_24, %c0_25] : memref<1x8x3xf32, #tpu.memory_space<vmem>>, vector<1x8x3xf32>
    %75 = vector.shape_cast %74 : vector<1x8x3xf32> to vector<8x3xf32>
    %cst_26 = arith.constant 0.000000e+00 : f32
    %76 = vector.broadcast %cst_26 : f32 to vector<8x128xf32>
    %77 = vector.extract_strided_slice %75 {offsets = [0, 0], sizes = [8, 1], strides = [1, 1]} : vector<8x3xf32> to vector<8x1xf32>
    %78 = vector.extract_strided_slice %73 {offsets = [0, 0], sizes = [1, 128], strides = [1, 1]} : vector<3x128xf32> to vector<1x128xf32>
    %79 = vector.broadcast %77 : vector<8x1xf32> to vector<8x128xf32>
    %80 = vector.broadcast %78 : vector<1x128xf32> to vector<8x128xf32>
    %81 = arith.mulf %79, %80 : vector<8x128xf32>
    %82 = arith.addf %76, %81 : vector<8x128xf32>
    %83 = vector.extract_strided_slice %75 {offsets = [0, 1], sizes = [8, 1], strides = [1, 1]} : vector<8x3xf32> to vector<8x1xf32>
    %84 = vector.extract_strided_slice %73 {offsets = [1, 0], sizes = [1, 128], strides = [1, 1]} : vector<3x128xf32> to vector<1x128xf32>
    %85 = vector.broadcast %83 : vector<8x1xf32> to vector<8x128xf32>
    %86 = vector.broadcast %84 : vector<1x128xf32> to vector<8x128xf32>
    %87 = arith.mulf %85, %86 : vector<8x128xf32>
    %88 = arith.addf %82, %87 : vector<8x128xf32>
    %89 = vector.extract_strided_slice %75 {offsets = [0, 2], sizes = [8, 1], strides = [1, 1]} : vector<8x3xf32> to vector<8x1xf32>
    %90 = vector.extract_strided_slice %73 {offsets = [2, 0], sizes = [1, 128], strides = [1, 1]} : vector<3x128xf32> to vector<1x128xf32>
    %91 = vector.broadcast %89 : vector<8x1xf32> to vector<8x128xf32>
    %92 = vector.broadcast %90 : vector<1x128xf32> to vector<8x128xf32>
    %93 = arith.mulf %91, %92 : vector<8x128xf32>
    %94 = arith.addf %88, %93 : vector<8x128xf32>
    %c0_27 = arith.constant 0 : index
    %c0_28 = arith.constant 0 : index
    %c0_29 = arith.constant 0 : index
    %95 = vector.load %arg4[%c0_27, %c0_28, %c0_29] : memref<1x7x128xf32, #tpu.memory_space<vmem>>, vector<1x7x128xf32>
    %96 = vector.shape_cast %95 : vector<1x7x128xf32> to vector<7x128xf32>
    %c0_30 = arith.constant 0 : index
    %c0_31 = arith.constant 0 : index
    %c0_32 = arith.constant 0 : index
    %97 = vector.load %arg5[%c0_30, %c0_31, %c0_32] : memref<1x8x7xf32, #tpu.memory_space<vmem>>, vector<1x8x7xf32>
    %98 = vector.shape_cast %97 : vector<1x8x7xf32> to vector<8x7xf32>
    %cst_33 = arith.constant 0.000000e+00 : f32
    %99 = vector.broadcast %cst_33 : f32 to vector<8x128xf32>
    %100 = vector.extract_strided_slice %98 {offsets = [0, 0], sizes = [8, 1], strides = [1, 1]} : vector<8x7xf32> to vector<8x1xf32>
    %101 = vector.extract_strided_slice %96 {offsets = [0, 0], sizes = [1, 128], strides = [1, 1]} : vector<7x128xf32> to vector<1x128xf32>
    %102 = vector.broadcast %100 : vector<8x1xf32> to vector<8x128xf32>
    %103 = vector.broadcast %101 : vector<1x128xf32> to vector<8x128xf32>
    %104 = arith.subf %102, %103 : vector<8x128xf32>
    %105 = math.absf %104 : vector<8x128xf32>
    %106 = arith.addf %99, %105 : vector<8x128xf32>
    %107 = vector.extract_strided_slice %98 {offsets = [0, 1], sizes = [8, 1], strides = [1, 1]} : vector<8x7xf32> to vector<8x1xf32>
    %108 = vector.extract_strided_slice %96 {offsets = [1, 0], sizes = [1, 128], strides = [1, 1]} : vector<7x128xf32> to vector<1x128xf32>
    %109 = vector.broadcast %107 : vector<8x1xf32> to vector<8x128xf32>
    %110 = vector.broadcast %108 : vector<1x128xf32> to vector<8x128xf32>
    %111 = arith.subf %109, %110 : vector<8x128xf32>
    %112 = math.absf %111 : vector<8x128xf32>
    %113 = arith.addf %106, %112 : vector<8x128xf32>
    %114 = vector.extract_strided_slice %98 {offsets = [0, 2], sizes = [8, 1], strides = [1, 1]} : vector<8x7xf32> to vector<8x1xf32>
    %115 = vector.extract_strided_slice %96 {offsets = [2, 0], sizes = [1, 128], strides = [1, 1]} : vector<7x128xf32> to vector<1x128xf32>
    %116 = vector.broadcast %114 : vector<8x1xf32> to vector<8x128xf32>
    %117 = vector.broadcast %115 : vector<1x128xf32> to vector<8x128xf32>
    %118 = arith.subf %116, %117 : vector<8x128xf32>
    %119 = math.absf %118 : vector<8x128xf32>
    %120 = arith.addf %113, %119 : vector<8x128xf32>
    %121 = vector.extract_strided_slice %98 {offsets = [0, 3], sizes = [8, 1], strides = [1, 1]} : vector<8x7xf32> to vector<8x1xf32>
    %122 = vector.extract_strided_slice %96 {offsets = [3, 0], sizes = [1, 128], strides = [1, 1]} : vector<7x128xf32> to vector<1x128xf32>
    %123 = vector.broadcast %121 : vector<8x1xf32> to vector<8x128xf32>
    %124 = vector.broadcast %122 : vector<1x128xf32> to vector<8x128xf32>
    %125 = arith.subf %123, %124 : vector<8x128xf32>
    %126 = math.absf %125 : vector<8x128xf32>
    %127 = arith.addf %120, %126 : vector<8x128xf32>
    %128 = vector.extract_strided_slice %98 {offsets = [0, 4], sizes = [8, 1], strides = [1, 1]} : vector<8x7xf32> to vector<8x1xf32>
    %129 = vector.extract_strided_slice %96 {offsets = [4, 0], sizes = [1, 128], strides = [1, 1]} : vector<7x128xf32> to vector<1x128xf32>
    %130 = vector.broadcast %128 : vector<8x1xf32> to vector<8x128xf32>
    %131 = vector.broadcast %129 : vector<1x128xf32> to vector<8x128xf32>
    %132 = arith.subf %130, %131 : vector<8x128xf32>
    %133 = math.absf %132 : vector<8x128xf32>
    %134 = arith.addf %127, %133 : vector<8x128xf32>
    %135 = vector.extract_strided_slice %98 {offsets = [0, 5], sizes = [8, 1], strides = [1, 1]} : vector<8x7xf32> to vector<8x1xf32>
    %136 = vector.extract_strided_slice %96 {offsets = [5, 0], sizes = [1, 128], strides = [1, 1]} : vector<7x128xf32> to vector<1x128xf32>
    %137 = vector.broadcast %135 : vector<8x1xf32> to vector<8x128xf32>
    %138 = vector.broadcast %136 : vector<1x128xf32> to vector<8x128xf32>
    %139 = arith.subf %137, %138 : vector<8x128xf32>
    %140 = math.absf %139 : vector<8x128xf32>
    %141 = arith.addf %134, %140 : vector<8x128xf32>
    %142 = vector.extract_strided_slice %98 {offsets = [0, 6], sizes = [8, 1], strides = [1, 1]} : vector<8x7xf32> to vector<8x1xf32>
    %143 = vector.extract_strided_slice %96 {offsets = [6, 0], sizes = [1, 128], strides = [1, 1]} : vector<7x128xf32> to vector<1x128xf32>
    %144 = vector.broadcast %142 : vector<8x1xf32> to vector<8x128xf32>
    %145 = vector.broadcast %143 : vector<1x128xf32> to vector<8x128xf32>
    %146 = arith.subf %144, %145 : vector<8x128xf32>
    %147 = math.absf %146 : vector<8x128xf32>
    %148 = vector.extract_strided_slice %96 {offsets = [0, 0], sizes = [3, 128], strides = [1, 1]} : vector<7x128xf32> to vector<3x128xf32>
    %149 = vector.extract_strided_slice %96 {offsets = [3, 0], sizes = [3, 128], strides = [1, 1]} : vector<7x128xf32> to vector<3x128xf32>
    %cst_34 = arith.constant 5.000000e-01 : f32
    %150 = vector.broadcast %cst_34 : f32 to vector<3x128xf32>
    %151 = arith.mulf %150, %149 : vector<3x128xf32>
    %152 = arith.subf %148, %151 : vector<3x128xf32>
    %153 = arith.cmpf one, %152, %152 : vector<3x128xf32>
    %cst_35 = arith.constant 0.000000e+00 : f32
    %154 = vector.broadcast %cst_35 : f32 to vector<3x128xf32>
    %155 = arith.select %153, %154, %152 : vector<3x128xi1>, vector<3x128xf32>
    %cst_36 = arith.constant 0x7F800000 : f32
    %156 = vector.broadcast %cst_36 : f32 to vector<3x128xf32>
    %157 = arith.cmpf oeq, %155, %156 : vector<3x128xf32>
    %cst_37 = arith.constant 3.40282347E+38 : f32
    %158 = vector.broadcast %cst_37 : f32 to vector<3x128xf32>
    %159 = arith.select %157, %158, %155 : vector<3x128xi1>, vector<3x128xf32>
    %cst_38 = arith.constant 0xFF800000 : f32
    %160 = vector.broadcast %cst_38 : f32 to vector<3x128xf32>
    %161 = arith.cmpf oeq, %159, %160 : vector<3x128xf32>
    %cst_39 = arith.constant -3.40282347E+38 : f32
    %162 = vector.broadcast %cst_39 : f32 to vector<3x128xf32>
    %163 = arith.select %161, %162, %159 : vector<3x128xi1>, vector<3x128xf32>
    %164 = vector.extract_strided_slice %96 {offsets = [0, 0], sizes = [3, 128], strides = [1, 1]} : vector<7x128xf32> to vector<3x128xf32>
    %165 = vector.extract_strided_slice %96 {offsets = [3, 0], sizes = [3, 128], strides = [1, 1]} : vector<7x128xf32> to vector<3x128xf32>
    %cst_40 = arith.constant 5.000000e-01 : f32
    %166 = vector.broadcast %cst_40 : f32 to vector<3x128xf32>
    %167 = arith.mulf %166, %165 : vector<3x128xf32>
    %168 = arith.addf %164, %167 : vector<3x128xf32>
    %169 = arith.cmpf one, %168, %168 : vector<3x128xf32>
    %cst_41 = arith.constant 0.000000e+00 : f32
    %170 = vector.broadcast %cst_41 : f32 to vector<3x128xf32>
    %171 = arith.select %169, %170, %168 : vector<3x128xi1>, vector<3x128xf32>
    %cst_42 = arith.constant 0x7F800000 : f32
    %172 = vector.broadcast %cst_42 : f32 to vector<3x128xf32>
    %173 = arith.cmpf oeq, %171, %172 : vector<3x128xf32>
    %cst_43 = arith.constant 3.40282347E+38 : f32
    %174 = vector.broadcast %cst_43 : f32 to vector<3x128xf32>
    %175 = arith.select %173, %174, %171 : vector<3x128xi1>, vector<3x128xf32>
    %cst_44 = arith.constant 0xFF800000 : f32
    %176 = vector.broadcast %cst_44 : f32 to vector<3x128xf32>
    %177 = arith.cmpf oeq, %175, %176 : vector<3x128xf32>
    %cst_45 = arith.constant -3.40282347E+38 : f32
    %178 = vector.broadcast %cst_45 : f32 to vector<3x128xf32>
    %179 = arith.select %177, %178, %175 : vector<3x128xi1>, vector<3x128xf32>
    %180 = vector.extract_strided_slice %98 {offsets = [0, 0], sizes = [8, 3], strides = [1, 1]} : vector<8x7xf32> to vector<8x3xf32>
    %181 = vector.extract_strided_slice %98 {offsets = [0, 3], sizes = [8, 3], strides = [1, 1]} : vector<8x7xf32> to vector<8x3xf32>
    %cst_46 = arith.constant 5.000000e-01 : f32
    %182 = vector.broadcast %cst_46 : f32 to vector<8x3xf32>
    %183 = arith.mulf %182, %181 : vector<8x3xf32>
    %184 = arith.subf %180, %183 : vector<8x3xf32>
    %185 = arith.cmpf one, %184, %184 : vector<8x3xf32>
    %cst_47 = arith.constant 0.000000e+00 : f32
    %186 = vector.broadcast %cst_47 : f32 to vector<8x3xf32>
    %187 = arith.select %185, %186, %184 : vector<8x3xi1>, vector<8x3xf32>
    %cst_48 = arith.constant 0x7F800000 : f32
    %188 = vector.broadcast %cst_48 : f32 to vector<8x3xf32>
    %189 = arith.cmpf oeq, %187, %188 : vector<8x3xf32>
    %cst_49 = arith.constant 3.40282347E+38 : f32
    %190 = vector.broadcast %cst_49 : f32 to vector<8x3xf32>
    %191 = arith.select %189, %190, %187 : vector<8x3xi1>, vector<8x3xf32>
    %cst_50 = arith.constant 0xFF800000 : f32
    %192 = vector.broadcast %cst_50 : f32 to vector<8x3xf32>
    %193 = arith.cmpf oeq, %191, %192 : vector<8x3xf32>
    %cst_51 = arith.constant -3.40282347E+38 : f32
    %194 = vector.broadcast %cst_51 : f32 to vector<8x3xf32>
    %195 = arith.select %193, %194, %191 : vector<8x3xi1>, vector<8x3xf32>
    %196 = vector.extract_strided_slice %98 {offsets = [0, 0], sizes = [8, 3], strides = [1, 1]} : vector<8x7xf32> to vector<8x3xf32>
    %197 = vector.extract_strided_slice %98 {offsets = [0, 3], sizes = [8, 3], strides = [1, 1]} : vector<8x7xf32> to vector<8x3xf32>
    %cst_52 = arith.constant 5.000000e-01 : f32
    %198 = vector.broadcast %cst_52 : f32 to vector<8x3xf32>
    %199 = arith.mulf %198, %197 : vector<8x3xf32>
    %200 = arith.addf %196, %199 : vector<8x3xf32>
    %201 = arith.cmpf one, %200, %200 : vector<8x3xf32>
    %cst_53 = arith.constant 0.000000e+00 : f32
    %202 = vector.broadcast %cst_53 : f32 to vector<8x3xf32>
    %203 = arith.select %201, %202, %200 : vector<8x3xi1>, vector<8x3xf32>
    %cst_54 = arith.constant 0x7F800000 : f32
    %204 = vector.broadcast %cst_54 : f32 to vector<8x3xf32>
    %205 = arith.cmpf oeq, %203, %204 : vector<8x3xf32>
    %cst_55 = arith.constant 3.40282347E+38 : f32
    %206 = vector.broadcast %cst_55 : f32 to vector<8x3xf32>
    %207 = arith.select %205, %206, %203 : vector<8x3xi1>, vector<8x3xf32>
    %cst_56 = arith.constant 0xFF800000 : f32
    %208 = vector.broadcast %cst_56 : f32 to vector<8x3xf32>
    %209 = arith.cmpf oeq, %207, %208 : vector<8x3xf32>
    %cst_57 = arith.constant -3.40282347E+38 : f32
    %210 = vector.broadcast %cst_57 : f32 to vector<8x3xf32>
    %211 = arith.select %209, %210, %207 : vector<8x3xi1>, vector<8x3xf32>
    %cst_58 = arith.constant 1.000000e+00 : f32
    %212 = vector.broadcast %cst_58 : f32 to vector<8x128xf32>
    %cst_59 = arith.constant 1.000000e+00 : f32
    %213 = vector.broadcast %cst_59 : f32 to vector<8x128xf32>
    %cst_60 = arith.constant 1.000000e+00 : f32
    %214 = vector.broadcast %cst_60 : f32 to vector<1x128xf32>
    %cst_61 = arith.constant 1.000000e+00 : f32
    %215 = vector.broadcast %cst_61 : f32 to vector<8x1xf32>
    %216 = vector.extract_strided_slice %163 {offsets = [0, 0], sizes = [1, 128], strides = [1, 1]} : vector<3x128xf32> to vector<1x128xf32>
    %217 = vector.extract_strided_slice %179 {offsets = [0, 0], sizes = [1, 128], strides = [1, 1]} : vector<3x128xf32> to vector<1x128xf32>
    %218 = vector.extract_strided_slice %195 {offsets = [0, 0], sizes = [8, 1], strides = [1, 1]} : vector<8x3xf32> to vector<8x1xf32>
    %219 = vector.extract_strided_slice %211 {offsets = [0, 0], sizes = [8, 1], strides = [1, 1]} : vector<8x3xf32> to vector<8x1xf32>
    %220 = vector.broadcast %217 : vector<1x128xf32> to vector<8x128xf32>
    %221 = vector.broadcast %219 : vector<8x1xf32> to vector<8x128xf32>
    %222 = arith.minimumf %220, %221 : vector<8x128xf32>
    %223 = vector.broadcast %216 : vector<1x128xf32> to vector<8x128xf32>
    %224 = vector.broadcast %218 : vector<8x1xf32> to vector<8x128xf32>
    %225 = arith.maximumf %223, %224 : vector<8x128xf32>
    %226 = arith.subf %222, %225 : vector<8x128xf32>
    %cst_62 = arith.constant 0.000000e+00 : f32
    %227 = vector.broadcast %cst_62 : f32 to vector<8x128xf32>
    %228 = arith.maximumf %226, %227 : vector<8x128xf32>
    %229 = arith.mulf %212, %228 : vector<8x128xf32>
    %230 = vector.broadcast %217 : vector<1x128xf32> to vector<8x128xf32>
    %231 = vector.broadcast %219 : vector<8x1xf32> to vector<8x128xf32>
    %232 = arith.maximumf %230, %231 : vector<8x128xf32>
    %233 = vector.broadcast %216 : vector<1x128xf32> to vector<8x128xf32>
    %234 = vector.broadcast %218 : vector<8x1xf32> to vector<8x128xf32>
    %235 = arith.minimumf %233, %234 : vector<8x128xf32>
    %236 = arith.subf %232, %235 : vector<8x128xf32>
    %cst_63 = arith.constant 0.000000e+00 : f32
    %237 = vector.broadcast %cst_63 : f32 to vector<8x128xf32>
    %238 = arith.maximumf %236, %237 : vector<8x128xf32>
    %239 = arith.mulf %213, %238 : vector<8x128xf32>
    %240 = arith.subf %217, %216 : vector<1x128xf32>
    %241 = arith.mulf %214, %240 : vector<1x128xf32>
    %242 = arith.subf %219, %218 : vector<8x1xf32>
    %243 = arith.mulf %215, %242 : vector<8x1xf32>
    %244 = vector.extract_strided_slice %163 {offsets = [1, 0], sizes = [1, 128], strides = [1, 1]} : vector<3x128xf32> to vector<1x128xf32>
    %245 = vector.extract_strided_slice %179 {offsets = [1, 0], sizes = [1, 128], strides = [1, 1]} : vector<3x128xf32> to vector<1x128xf32>
    %246 = vector.extract_strided_slice %195 {offsets = [0, 1], sizes = [8, 1], strides = [1, 1]} : vector<8x3xf32> to vector<8x1xf32>
    %247 = vector.extract_strided_slice %211 {offsets = [0, 1], sizes = [8, 1], strides = [1, 1]} : vector<8x3xf32> to vector<8x1xf32>
    %248 = vector.broadcast %245 : vector<1x128xf32> to vector<8x128xf32>
    %249 = vector.broadcast %247 : vector<8x1xf32> to vector<8x128xf32>
    %250 = arith.minimumf %248, %249 : vector<8x128xf32>
    %251 = vector.broadcast %244 : vector<1x128xf32> to vector<8x128xf32>
    %252 = vector.broadcast %246 : vector<8x1xf32> to vector<8x128xf32>
    %253 = arith.maximumf %251, %252 : vector<8x128xf32>
    %254 = arith.subf %250, %253 : vector<8x128xf32>
    %cst_64 = arith.constant 0.000000e+00 : f32
    %255 = vector.broadcast %cst_64 : f32 to vector<8x128xf32>
    %256 = arith.maximumf %254, %255 : vector<8x128xf32>
    %257 = arith.mulf %229, %256 : vector<8x128xf32>
    %258 = vector.broadcast %245 : vector<1x128xf32> to vector<8x128xf32>
    %259 = vector.broadcast %247 : vector<8x1xf32> to vector<8x128xf32>
    %260 = arith.maximumf %258, %259 : vector<8x128xf32>
    %261 = vector.broadcast %244 : vector<1x128xf32> to vector<8x128xf32>
    %262 = vector.broadcast %246 : vector<8x1xf32> to vector<8x128xf32>
    %263 = arith.minimumf %261, %262 : vector<8x128xf32>
    %264 = arith.subf %260, %263 : vector<8x128xf32>
    %cst_65 = arith.constant 0.000000e+00 : f32
    %265 = vector.broadcast %cst_65 : f32 to vector<8x128xf32>
    %266 = arith.maximumf %264, %265 : vector<8x128xf32>
    %267 = arith.mulf %239, %266 : vector<8x128xf32>
    %268 = arith.subf %245, %244 : vector<1x128xf32>
    %269 = arith.mulf %241, %268 : vector<1x128xf32>
    %270 = arith.subf %247, %246 : vector<8x1xf32>
    %271 = arith.mulf %243, %270 : vector<8x1xf32>
    %272 = vector.extract_strided_slice %163 {offsets = [2, 0], sizes = [1, 128], strides = [1, 1]} : vector<3x128xf32> to vector<1x128xf32>
    %273 = vector.extract_strided_slice %179 {offsets = [2, 0], sizes = [1, 128], strides = [1, 1]} : vector<3x128xf32> to vector<1x128xf32>
    %274 = vector.extract_strided_slice %195 {offsets = [0, 2], sizes = [8, 1], strides = [1, 1]} : vector<8x3xf32> to vector<8x1xf32>
    %275 = vector.extract_strided_slice %211 {offsets = [0, 2], sizes = [8, 1], strides = [1, 1]} : vector<8x3xf32> to vector<8x1xf32>
    %276 = vector.broadcast %273 : vector<1x128xf32> to vector<8x128xf32>
    %277 = vector.broadcast %275 : vector<8x1xf32> to vector<8x128xf32>
    %278 = arith.minimumf %276, %277 : vector<8x128xf32>
    %279 = vector.broadcast %272 : vector<1x128xf32> to vector<8x128xf32>
    %280 = vector.broadcast %274 : vector<8x1xf32> to vector<8x128xf32>
    %281 = arith.maximumf %279, %280 : vector<8x128xf32>
    %282 = arith.subf %278, %281 : vector<8x128xf32>
    %cst_66 = arith.constant 0.000000e+00 : f32
    %283 = vector.broadcast %cst_66 : f32 to vector<8x128xf32>
    %284 = arith.maximumf %282, %283 : vector<8x128xf32>
    %285 = arith.mulf %257, %284 : vector<8x128xf32>
    %286 = vector.broadcast %273 : vector<1x128xf32> to vector<8x128xf32>
    %287 = vector.broadcast %275 : vector<8x1xf32> to vector<8x128xf32>
    %288 = arith.maximumf %286, %287 : vector<8x128xf32>
    %289 = vector.broadcast %272 : vector<1x128xf32> to vector<8x128xf32>
    %290 = vector.broadcast %274 : vector<8x1xf32> to vector<8x128xf32>
    %291 = arith.minimumf %289, %290 : vector<8x128xf32>
    %292 = arith.subf %288, %291 : vector<8x128xf32>
    %cst_67 = arith.constant 0.000000e+00 : f32
    %293 = vector.broadcast %cst_67 : f32 to vector<8x128xf32>
    %294 = arith.maximumf %292, %293 : vector<8x128xf32>
    %295 = arith.mulf %267, %294 : vector<8x128xf32>
    %296 = arith.subf %273, %272 : vector<1x128xf32>
    %297 = arith.mulf %269, %296 : vector<1x128xf32>
    %298 = arith.subf %275, %274 : vector<8x1xf32>
    %299 = arith.mulf %271, %298 : vector<8x1xf32>
    %300 = vector.broadcast %297 : vector<1x128xf32> to vector<8x128xf32>
    %301 = vector.broadcast %299 : vector<8x1xf32> to vector<8x128xf32>
    %302 = arith.addf %300, %301 : vector<8x128xf32>
    %303 = arith.subf %302, %285 : vector<8x128xf32>
    %cst_68 = arith.constant 9.99999996E-13 : f32
    %304 = vector.broadcast %cst_68 : f32 to vector<8x128xf32>
    %305 = arith.maximumf %303, %304 : vector<8x128xf32>
    %306 = tpu.reciprocal %305 {approx = true} : vector<8x128xf32> -> vector<8x128xf32>
    %307 = arith.mulf %305, %306 : vector<8x128xf32>
    %cst_69 = arith.constant 2.000000e+00 : f32
    %308 = vector.broadcast %cst_69 : f32 to vector<8x128xf32>
    %309 = arith.subf %308, %307 : vector<8x128xf32>
    %310 = arith.mulf %306, %309 : vector<8x128xf32>
    %cst_70 = arith.constant 9.99999996E-13 : f32
    %311 = vector.broadcast %cst_70 : f32 to vector<8x128xf32>
    %312 = arith.maximumf %295, %311 : vector<8x128xf32>
    %313 = tpu.reciprocal %312 {approx = true} : vector<8x128xf32> -> vector<8x128xf32>
    %314 = arith.mulf %312, %313 : vector<8x128xf32>
    %cst_71 = arith.constant 2.000000e+00 : f32
    %315 = vector.broadcast %cst_71 : f32 to vector<8x128xf32>
    %316 = arith.subf %315, %314 : vector<8x128xf32>
    %317 = arith.mulf %313, %316 : vector<8x128xf32>
    %318 = arith.mulf %285, %310 : vector<8x128xf32>
    %cst_72 = arith.constant 1.000000e+00 : f32
    %319 = vector.broadcast %cst_72 : f32 to vector<8x128xf32>
    %320 = arith.subf %318, %319 : vector<8x128xf32>
    %321 = arith.mulf %303, %317 : vector<8x128xf32>
    %322 = arith.addf %320, %321 : vector<8x128xf32>
    %cst_73 = arith.constant 0.000000e+00 : f32
    %323 = vector.broadcast %cst_73 : f32 to vector<8x128xf32>
    %324 = arith.subf %323, %322 : vector<8x128xf32>
    %cst_74 = arith.constant 1.000000e+00 : f32
    %325 = vector.broadcast %cst_74 : f32 to vector<8x128xf32>
    %326 = arith.mulf %325, %141 : vector<8x128xf32>
    %cst_75 = arith.constant 1.000000e+00 : f32
    %327 = vector.broadcast %cst_75 : f32 to vector<8x128xf32>
    %328 = arith.mulf %327, %94 : vector<8x128xf32>
    %329 = arith.addf %326, %328 : vector<8x128xf32>
    %cst_76 = arith.constant 1.000000e+00 : f32
    %330 = vector.broadcast %cst_76 : f32 to vector<8x128xf32>
    %331 = arith.mulf %330, %324 : vector<8x128xf32>
    %332 = arith.addf %329, %331 : vector<8x128xf32>
    %cst_77 = arith.constant 1.000000e+00 : f32
    %333 = vector.broadcast %cst_77 : f32 to vector<8x128xf32>
    %334 = arith.mulf %333, %147 : vector<8x128xf32>
    %335 = arith.addf %332, %334 : vector<8x128xf32>
    %c0_78 = arith.constant 0 : index
    %c0_79 = arith.constant 0 : index
    %c0_80 = arith.constant 0 : index
    %336 = vector.load %arg7[%c0_78, %c0_79, %c0_80] : memref<1x8x128xf32, #tpu.memory_space<vmem>>, vector<1x8x128xf32>
    %337 = vector.shape_cast %336 : vector<1x8x128xf32> to vector<8x128xf32>
    %338 = vector.shape_cast %335 : vector<8x128xf32> to vector<1x8x128xf32>
    tpu.vector_store %arg7[%c0_78, %c0_79, %c0_80], %338 {strides = array<i32>} : memref<1x8x128xf32, #tpu.memory_space<vmem>>, vector<1x8x128xf32>,
    return
  }
  func.func @transform_0(%arg0: i32, %arg1: i32) -> (i32, i32, i32) {
    %c0_i32 = arith.constant 0 : i32
    %c0_i32_0 = arith.constant 0 : i32
    return %arg0, %c0_i32, %arg1 : i32, i32, i32
  }
  func.func @transform_1(%arg0: i32, %arg1: i32) -> (i32, i32, i32) {
    %c0_i32 = arith.constant 0 : i32
    %c0_i32_0 = arith.constant 0 : i32
    return %arg0, %c0_i32, %arg1 : i32, i32, i32
  }
  func.func @transform_2(%arg0: i32, %arg1: i32) -> (i32, i32, i32) {
    %c0_i32 = arith.constant 0 : i32
    %c0_i32_0 = arith.constant 0 : i32
    return %arg0, %c0_i32, %arg1 : i32, i32, i32
  }
  func.func @transform_3(%arg0: i32, %arg1: i32) -> (i32, i32, i32) {
    %c0_i32 = arith.constant 0 : i32
    %c0_i32_0 = arith.constant 0 : i32
    %c0_i32_1 = arith.constant 0 : i32
    return %arg0, %c0_i32, %c0_i32_0 : i32, i32, i32
  }
  func.func @transform_4(%arg0: i32, %arg1: i32) -> (i32, i32, i32) {
    %c0_i32 = arith.constant 0 : i32
    %c0_i32_0 = arith.constant 0 : i32
    %c0_i32_1 = arith.constant 0 : i32
    return %arg0, %c0_i32, %c0_i32_0 : i32, i32, i32
  }
  func.func @transform_5(%arg0: i32, %arg1: i32) -> (i32, i32, i32) {
    %c0_i32 = arith.constant 0 : i32
    %c0_i32_0 = arith.constant 0 : i32
    return %arg0, %c0_i32, %arg1 : i32, i32, i32
  }
}

</mosaic_0001>

<llo_original>
// kernel: tpu_custom_call.1
$region0: #{tpu_custom_call.1}
  #allocation0 [shape = 'u32[]', space=smem, size = 0x4, offset = 0x4, fixed_abs, tag = 'smem constant byte address 0x4 - core index']
  #allocation1 [shape = 'u32[72,128]{1,0:T(1,128)}', space=vmem, size = 0x9000, scoped, tag = 'internal scratch']
  %s0 = inlined_call_operand.vmem [shape: f32[2,3,128], index: 0, kind: input, shape index: {}]
  %s1 = inlined_call_operand.vmem [shape: f32[2,1,128], index: 1, kind: input, shape index: {}]
  %s2 = inlined_call_operand.vmem [shape: f32[2,7,128], index: 2, kind: input, shape index: {}]
  %s3 = inlined_call_operand.vmem [shape: f32[2,8,7], index: 3, kind: input, shape index: {}]
  %s4 = inlined_call_operand.vmem [shape: f32[2,8,3], index: 4, kind: input, shape index: {}]
  %s5 = inlined_call_operand.hbm [shape: f32[2,8,128], index: 5, kind: output, shape index: {}]
  %s6 = sld [smem:[#allocation0]]
  $region53: #{tpu_custom_call.1} parent=0
    _
  %s8 = ssub.s32 1, %s6
  %s9 = scalar_select 0, %s8, %s6
  $region1: #{tpu_custom_call.1} parent=0
    #allocation2 [shape = 'u8[8192]{0}', space=vmem, size = 0x2000, scoped, tag = 'output window, operand 0']
    #allocation3 [shape = 's32[2]{0}', space=sflag, size = 0x8, scoped, tag = 'scoped memory for tpu_custom_call.1']
    %10 = vsyncpa [#allocation3], 0
    %s11 = scalar_lea.sflag [#allocation3], 1
    %12 = vsyncpa %s11, 0
    loop: start=0, step=1, limit=4
    $region2: #{tpu_custom_call.1} parent=1 // loop_pre_header
      _
    $region3: #{tpu_custom_call.1} parent=1 // loop_header
      %s14 = sphi 0, %s18
      %p15 = scmp.ge.s32.totalorder %s14, 4
      %s21 = sphi 0, %s33
      %s22 = sphi 0, %s29
      %s23 = sphi 0, %s21
      %s24 = sphi 0, %s22
      %s25 = sphi 0, %s23
      %s26 = sphi 0, %s24
      %s38 = sphi 0, %s40
      %s41 = sphi 0, %s38
      %s42 = sphi 0, %s41
      %s58 = sphi 0, %s42
      %s66 = sphi 0, %s68
      %s69 = sphi 0, %s66
      %s70 = sphi 0, %s69
      %s86 = sphi 0, %s70
      %s94 = sphi 0, %s96
      %s97 = sphi 0, %s94
      %s98 = sphi 0, %s97
      %s114 = sphi 0, %s98
      %s120 = sphi 0, %s122
      %s123 = sphi 0, %s120
      %s124 = sphi 0, %s123
      %s140 = sphi 0, %s124
      %s146 = sphi 0, %s148
      %s149 = sphi 0, %s146
      %s150 = sphi 0, %s149
      %s166 = sphi 0, %s150
      %s174 = sphi 0, %s176
      %s177 = sphi 0, %s174
      %s178 = sphi 0, %s177
      %s194 = sphi 0, %s178
    $region4: #{tpu_custom_call.1} parent=1 // loop_header_branch
      %17 = sbr.rel (%p15) target = $region8
    $region5: #{tpu_custom_call.1} parent=1 // loop_body
      %s19 = ssub.s32 %s14, 1
      %s20 = ssub.s32 %s14, 2
      %s27 = sadd.s32 1, %s22
      %p28 = scmp.ge.s32.totalorder %s27, 1
      %s29 = scalar_select %p28, 0, %s27
      %s30 = sadd.s32 1, %s21
      %s31 = scalar_select %p28, %s30, %s21
      %p32 = scmp.ge.s32.totalorder %s31, 2
      %s33 = scalar_select %p32, 0, %s31
      %s34 = ssub.s32 %s21, %s33
      %s35 = ssub.s32 %s22, %s29
      %s36 = sor.u32 %s34, %s35
      %p37 = scmp.eq.s32.totalorder %s36, 0
      %s39 = sadd.s32 %s38, 1
      %s40 = scalar_select %p37, %s38, %s39
      %p43 = pneg %p37
      %p44 = scmp.eq.s32.totalorder %s14, 1
      %p45 = por %p43, %p44
      %p46 = scmp.ne.s32.totalorder %s38, %s41
      %p47 = scmp.eq.s32.totalorder %s14, 0
      %p48 = por %p46, %p47
      %p49 = scmp.ne.s32.totalorder %s38, %s41
      %p50 = scmp.eq.s32.totalorder %s19, 1
      %p51 = por %p49, %p50
      %p52 = scmp.ne.s32.totalorder %s41, %s42
      %p53 = scmp.eq.s32.totalorder %s19, 0
      %p54 = por %p52, %p53
      %p55 = scmp.ne.s32.totalorder %s41, %s42
      %p56 = scmp.eq.s32.totalorder %s20, 1
      %p57 = por %p55, %p56
      %p59 = scmp.ne.s32.totalorder %s42, %s58
      %p60 = scmp.eq.s32.totalorder %s20, 0
      %p61 = por %p59, %p60
      %s62 = ssub.s32 %s21, %s33
      %s63 = ssub.s32 %s22, %s29
      %s64 = sor.u32 %s62, %s63
      %p65 = scmp.eq.s32.totalorder %s64, 0
      %s67 = sadd.s32 %s66, 1
      %s68 = scalar_select %p65, %s66, %s67
      %p71 = pneg %p65
      %p72 = scmp.eq.s32.totalorder %s14, 1
      %p73 = por %p71, %p72
      %p74 = scmp.ne.s32.totalorder %s66, %s69
      %p75 = scmp.eq.s32.totalorder %s14, 0
      %p76 = por %p74, %p75
      %p77 = scmp.ne.s32.totalorder %s66, %s69
      %p78 = scmp.eq.s32.totalorder %s19, 1
      %p79 = por %p77, %p78
      %p80 = scmp.ne.s32.totalorder %s69, %s70
      %p81 = scmp.eq.s32.totalorder %s19, 0
      %p82 = por %p80, %p81
      %p83 = scmp.ne.s32.totalorder %s69, %s70
      %p84 = scmp.eq.s32.totalorder %s20, 1
      %p85 = por %p83, %p84
      %p87 = scmp.ne.s32.totalorder %s70, %s86
      %p88 = scmp.eq.s32.totalorder %s20, 0
      %p89 = por %p87, %p88
      %s90 = ssub.s32 %s21, %s33
      %s91 = ssub.s32 %s22, %s29
      %s92 = sor.u32 %s90, %s91
      %p93 = scmp.eq.s32.totalorder %s92, 0
      %s95 = sadd.s32 %s94, 1
      %s96 = scalar_select %p93, %s94, %s95
      %p99 = pneg %p93
      %p100 = scmp.eq.s32.totalorder %s14, 1
      %p101 = por %p99, %p100
      %p102 = scmp.ne.s32.totalorder %s94, %s97
      %p103 = scmp.eq.s32.totalorder %s14, 0
      %p104 = por %p102, %p103
      %p105 = scmp.ne.s32.totalorder %s94, %s97
      %p106 = scmp.eq.s32.totalorder %s19, 1
      %p107 = por %p105, %p106
      %p108 = scmp.ne.s32.totalorder %s97, %s98
      %p109 = scmp.eq.s32.totalorder %s19, 0
      %p110 = por %p108, %p109
      %p111 = scmp.ne.s32.totalorder %s97, %s98
      %p112 = scmp.eq.s32.totalorder %s20, 1
      %p113 = por %p111, %p112
      %p115 = scmp.ne.s32.totalorder %s98, %s114
      %p116 = scmp.eq.s32.totalorder %s20, 0
      %p117 = por %p115, %p116
      %s118 = ssub.s32 %s21, %s33
      %p119 = scmp.eq.s32.totalorder %s118, 0
      %s121 = sadd.s32 %s120, 1
      %s122 = scalar_select %p119, %s120, %s121
      %p125 = pneg %p119
      %p126 = scmp.eq.s32.totalorder %s14, 1
      %p127 = por %p125, %p126
      %p128 = scmp.ne.s32.totalorder %s120, %s123
      %p129 = scmp.eq.s32.totalorder %s14, 0
      %p130 = por %p128, %p129
      %p131 = scmp.ne.s32.totalorder %s120, %s123
      %p132 = scmp.eq.s32.totalorder %s19, 1
      %p133 = por %p131, %p132
      %p134 = scmp.ne.s32.totalorder %s123, %s124
      %p135 = scmp.eq.s32.totalorder %s19, 0
      %p136 = por %p134, %p135
      %p137 = scmp.ne.s32.totalorder %s123, %s124
      %p138 = scmp.eq.s32.totalorder %s20, 1
      %p139 = por %p137, %p138
      %p141 = scmp.ne.s32.totalorder %s124, %s140
      %p142 = scmp.eq.s32.totalorder %s20, 0
      %p143 = por %p141, %p142
      %s144 = ssub.s32 %s21, %s33
      %p145 = scmp.eq.s32.totalorder %s144, 0
      %s147 = sadd.s32 %s146, 1
      %s148 = scalar_select %p145, %s146, %s147
      %p151 = pneg %p145
      %p152 = scmp.eq.s32.totalorder %s14, 1
      %p153 = por %p151, %p152
      %p154 = scmp.ne.s32.totalorder %s146, %s149
      %p155 = scmp.eq.s32.totalorder %s14, 0
      %p156 = por %p154, %p155
      %p157 = scmp.ne.s32.totalorder %s146, %s149
      %p158 = scmp.eq.s32.totalorder %s19, 1
      %p159 = por %p157, %p158
      %p160 = scmp.ne.s32.totalorder %s149, %s150
      %p161 = scmp.eq.s32.totalorder %s19, 0
      %p162 = por %p160, %p161
      %p163 = scmp.ne.s32.totalorder %s149, %s150
      %p164 = scmp.eq.s32.totalorder %s20, 1
      %p165 = por %p163, %p164
      %p167 = scmp.ne.s32.totalorder %s150, %s166
      %p168 = scmp.eq.s32.totalorder %s20, 0
      %p169 = por %p167, %p168
      %s170 = ssub.s32 %s21, %s33
      %s171 = ssub.s32 %s22, %s29
      %s172 = sor.u32 %s170, %s171
      %p173 = scmp.eq.s32.totalorder %s172, 0
      %s175 = sadd.s32 %s174, 1
      %s176 = scalar_select %p173, %s174, %s175
      %p179 = pneg %p173
      %p180 = scmp.eq.s32.totalorder %s14, 1
      %p181 = por %p179, %p180
      %p182 = scmp.ne.s32.totalorder %s174, %s177
      %p183 = scmp.eq.s32.totalorder %s14, 0
      %p184 = por %p182, %p183
      %p185 = scmp.ne.s32.totalorder %s174, %s177
      %p186 = scmp.eq.s32.totalorder %s19, 1
      %p187 = por %p185, %p186
      %p188 = scmp.ne.s32.totalorder %s177, %s178
      %p189 = scmp.eq.s32.totalorder %s19, 0
      %p190 = por %p188, %p189
      %p191 = scmp.ne.s32.totalorder %s177, %s178
      %p192 = scmp.eq.s32.totalorder %s20, 1
      %p193 = por %p191, %p192
      %p195 = scmp.ne.s32.totalorder %s178, %s194
      %p196 = scmp.eq.s32.totalorder %s20, 0
      %p197 = por %p195, %p196
      %p198 = scmp.le.s32.totalorder 1, %s14
      %p199 = scmp.lt.s32.totalorder %s14, 3
      %p200 = pnand %p198, %p199
      %p201 = pneg %p200
      // Predicated region
      $region9: #{tpu_custom_call.1} parent=5 // pred_check
        _
      $region10: #{tpu_custom_call.1} parent=5 // pred_check_branch
        %203 = sbr.rel (%p200) target = $region12
      $region11: #{tpu_custom_call.1} parent=5 // pred_region
        %s204 = ssub.s32 %s14, 1
      $region12: #{tpu_custom_call.1} parent=5 // pred_fallthru
        _
      %p205 = scmp.lt.s32.totalorder %s14, 2
      // Predicated region
      $region13: #{tpu_custom_call.1} parent=5 // pred_check
        %p206 = pneg %p205
      $region14: #{tpu_custom_call.1} parent=5 // pred_check_branch
        %208 = sbr.rel (%p206) target = $region16
      $region15: #{tpu_custom_call.1} parent=5 // pred_region
        // Predicated region
        $region17: #{tpu_custom_call.1} parent=15 // pred_check
          %p209 = pneg %p48
        $region18: #{tpu_custom_call.1} parent=15 // pred_check_branch
          %211 = sbr.rel (%p209) target = $region20
        $region19: #{tpu_custom_call.1} parent=15 // pred_region
          %p212 = scmp.lt.s32.totalorder %s21, 1
          %s213 = scalar_select %p212, %s21, 1
          %p214 = scmp.lt.s32.totalorder %s22, 0
          %s215 = scalar_select %p214, %s22, 0
          %s216 = sadd.s32 %s215, %s213
          %s217 = smul.addr %s216, 4
          %s218 = scalar_lea.vmem %s0, %s217
        $region20: #{tpu_custom_call.1} parent=15 // pred_fallthru
          _
        // Predicated region
        $region21: #{tpu_custom_call.1} parent=15 // pred_check
          %p219 = pneg %p76
        $region22: #{tpu_custom_call.1} parent=15 // pred_check_branch
          %221 = sbr.rel (%p219) target = $region24
        $region23: #{tpu_custom_call.1} parent=15 // pred_region
          %p222 = scmp.lt.s32.totalorder %s21, 1
          %s223 = scalar_select %p222, %s21, 1
          %p224 = scmp.lt.s32.totalorder %s22, 0
          %s225 = scalar_select %p224, %s22, 0
          %s226 = sadd.s32 %s225, %s223
          %s227 = scalar_lea.vmem %s1, %s226
        $region24: #{tpu_custom_call.1} parent=15 // pred_fallthru
          _
        // Predicated region
        $region25: #{tpu_custom_call.1} parent=15 // pred_check
          %p228 = pneg %p104
        $region26: #{tpu_custom_call.1} parent=15 // pred_check_branch
          %230 = sbr.rel (%p228) target = $region28
        $region27: #{tpu_custom_call.1} parent=15 // pred_region
          %p231 = scmp.lt.s32.totalorder %s21, 1
          %s232 = scalar_select %p231, %s21, 1
          %p233 = scmp.lt.s32.totalorder %s22, 0
          %s234 = scalar_select %p233, %s22, 0
          %s235 = sadd.s32 %s234, %s232
          %s236 = smul.addr %s235, 8
          %s237 = scalar_lea.vmem %s2, %s236
        $region28: #{tpu_custom_call.1} parent=15 // pred_fallthru
          _
        // Predicated region
        $region29: #{tpu_custom_call.1} parent=15 // pred_check
          %p238 = pneg %p130
        $region30: #{tpu_custom_call.1} parent=15 // pred_check_branch
          %240 = sbr.rel (%p238) target = $region32
        $region31: #{tpu_custom_call.1} parent=15 // pred_region
          %p241 = scmp.lt.s32.totalorder %s21, 1
          %s242 = scalar_select %p241, %s21, 1
          %s243 = smul.addr %s242, 8
          %s244 = scalar_lea.vmem %s3, %s243
        $region32: #{tpu_custom_call.1} parent=15 // pred_fallthru
          _
        // Predicated region
        $region33: #{tpu_custom_call.1} parent=15 // pred_check
          %p245 = pneg %p156
        $region34: #{tpu_custom_call.1} parent=15 // pred_check_branch
          %247 = sbr.rel (%p245) target = $region36
        $region35: #{tpu_custom_call.1} parent=15 // pred_region
          %p248 = scmp.lt.s32.totalorder %s21, 1
          %s249 = scalar_select %p248, %s21, 1
          %s250 = smul.addr %s249, 8
          %s251 = scalar_lea.vmem %s4, %s250
        $region36: #{tpu_custom_call.1} parent=15 // pred_fallthru
          _
      $region16: #{tpu_custom_call.1} parent=5 // pred_fallthru
        _
      %p252 = scmp.le.s32.totalorder 1, %s14
      %p253 = scmp.lt.s32.totalorder %s14, 3
      %p254 = pnand %p252, %p253
      %p255 = pneg %p254
      // Predicated region
      $region37: #{tpu_custom_call.1} parent=5 // pred_check
        _
      $region38: #{tpu_custom_call.1} parent=5 // pred_check_branch
        %257 = sbr.rel (%p254) target = $region40
      $region39: #{tpu_custom_call.1} parent=5 // pred_region
        %s258 = ssub.s32 %s14, 1
        %p259 = scmp.lt.s32.totalorder %s23, 1
        %s260 = scalar_select %p259, %s23, 1
        %p261 = scmp.lt.s32.totalorder %s24, 0
        %s262 = scalar_select %p261, %s24, 0
        %s263 = sadd.s32 %s262, %s260
        %s264 = smul.addr %s263, 4
        %s265 = scalar_lea.vmem %s0, %s264
        %p266 = pneg %p54
        %p267 = pneg %p51
        %p268 = scmp.lt.s32.totalorder %s23, 1
        %s269 = scalar_select %p268, %s23, 1
        %p270 = scmp.lt.s32.totalorder %s24, 0
        %s271 = scalar_select %p270, %s24, 0
        %s272 = sadd.s32 %s271, %s269
        %s273 = scalar_lea.vmem %s1, %s272
        %p274 = pneg %p82
        %p275 = pneg %p79
        %p276 = scmp.lt.s32.totalorder %s23, 1
        %s277 = scalar_select %p276, %s23, 1
        %p278 = scmp.lt.s32.totalorder %s24, 0
        %s279 = scalar_select %p278, %s24, 0
        %s280 = sadd.s32 %s279, %s277
        %s281 = smul.addr %s280, 8
        %s282 = scalar_lea.vmem %s2, %s281
        %p283 = pneg %p110
        %p284 = pneg %p107
        %p285 = scmp.lt.s32.totalorder %s23, 1
        %s286 = scalar_select %p285, %s23, 1
        %s287 = smul.addr %s286, 8
        %s288 = scalar_lea.vmem %s3, %s287
        %p289 = pneg %p136
        %p290 = pneg %p133
        %p291 = scmp.lt.s32.totalorder %s23, 1
        %s292 = scalar_select %p291, %s23, 1
        %s293 = smul.addr %s292, 8
        %s294 = scalar_lea.vmem %s4, %s293
        %p295 = pneg %p162
        %p296 = pneg %p159
        %p297 = pneg %p190
        %p298 = pneg %p187
        %s299 = sand.u32 %s177, 1
        %s300 = scalar_lea.sflag [#allocation3], %s299
        %s301 = sand.u32 %s177, 1
        %s302 = smul.addr %s301, 8
        %s303 = scalar_lea.vmem [#allocation2], %s302
        %p304 = scmp.lt.s32.totalorder %s23, 1
        %s305 = scalar_select %p304, %s23, 1
        %p306 = scmp.lt.s32.totalorder %s24, 0
        %s307 = scalar_select %p306, %s24, 0
        %s308 = sadd.s32 %s307, %s305
        %s309 = smul.addr %s308, 4
        %s310 = scalar_lea.vmem %s0, %s309
        %p311 = scmp.lt.s32.totalorder %s23, 1
        %s312 = scalar_select %p311, %s23, 1
        %p313 = scmp.lt.s32.totalorder %s24, 0
        %s314 = scalar_select %p313, %s24, 0
        %s315 = sadd.s32 %s314, %s312
        %s316 = scalar_lea.vmem %s1, %s315
        %p317 = scmp.lt.s32.totalorder %s23, 1
        %s318 = scalar_select %p317, %s23, 1
        %p319 = scmp.lt.s32.totalorder %s24, 0
        %s320 = scalar_select %p319, %s24, 0
        %s321 = sadd.s32 %s320, %s318
        %s322 = smul.addr %s321, 8
        %s323 = scalar_lea.vmem %s2, %s322
        %p324 = scmp.lt.s32.totalorder %s23, 1
        %s325 = scalar_select %p324, %s23, 1
        %s326 = smul.addr %s325, 8
        %s327 = scalar_lea.vmem %s3, %s326
        %p328 = scmp.lt.s32.totalorder %s23, 1
        %s329 = scalar_select %p328, %s23, 1
        %s330 = smul.addr %s329, 8
        %s331 = scalar_lea.vmem %s4, %s330
        %v332 = vld [vmem:[%s310] sm:$0x7]
        %v333 = vxor.u32 %v332, 2147483648
        %v334 = vmul.f32 %v333, 1.442695
        %v335 = vpow.pop %v334
        %v336 = vadd.f32 %v335, 1.0
        %v337 = vrcp.pop %v336
        %v338 = vmul.f32 %v336, %v337
        %v339 = vsub.f32 1.0, %v338
        %v340 = vmul.f32 %v337, %v339
        %v341 = vadd.f32 %v337, %v340
        %vm342 = vweird.f32 %v336
        %vm343 = vweird.f32 %v337
        %vm344 = vmor %vm342, %vm343
        %v345 = vsel %vm344, %v337, %v341
        %v346 = vand.u32 2147483647, %v336
        %vm347 = vcmp.eq.f32.partialorder %v346, 8.507059e+37
        %v348 = vand.u32 %v336, 2147483648
        %v349 = vor.u32 1.1754944e-38, %v348
        %v350 = vsel %vm347, %v349, %v345
        %v351 = vmul.f32 1.0, %v350
        %v352 = vld [vmem:[%s316] sm:$0x1]
        %v353 = vadd.f32 %v352, 1.0
        %v354 = vmul.f32 %v353, 0.5
        %v355 = vmax.f32 %v354, 0.0
        %v356 = vlaneseq
        %v357 = vshrl.u32 %v356, 7
        %vm358 = vcmp.eq.s32.totalorder %v357, 0
        %v359 = vsel %vm358, 0.68, 0.0
        %vm360 = vcmp.eq.s32.totalorder %v357, 1
        %v361 = vsel %vm360, 0.71, %v359
        %vm362 = vmor %vm358, %vm360
        %vm363 = vcmp.eq.s32.totalorder %v357, 2
        %v364 = vsel %vm363, 0.65, %v361
        %vm365 = vmor %vm362, %vm363
        %v366 = vsub.f32 1.0, %v364
        %v367 = vlog2.pop %v351
        %v368 = vmul.f32 %v367, 0.6931472
        %v369 = vmul.f32 %v366, %v368
        %v370 = vlog2.pop %v355
        %v371 = vmul.f32 %v370, 0.6931472
        %v373 = vperm.slane %v371, 0
        %v375 = vmul.f32 %v364, %v373
        %v376 = vadd.f32 %v369, %v375
        %v377 = vmul.f32 %v376, 1.442695
        %v378 = vpow.pop %v377
        %v379 = vsel %vm365, 1, 0
        %vm380 = vcmp.eq.s32.totalorder %v379, 1
        %v381 = vsel %vm380, %v378, %v351
        %v382 = vsub.f32 1.0, %v381
        %v383 = vmul.f32 %v381, %v381
        %v384 = vmul.f32 %v383, 0.75
        %v385 = vadd.f32 %v382, 1e-08
        %v386 = vlog2.pop %v385
        %v387 = vmul.f32 %v386, 0.6931472
        %v388 = vsub.f32 0.0, %v387
        %v389 = vmul.f32 %v384, %v388
        %v390 = vmul.f32 %v382, %v382
        %v391 = vmul.f32 %v390, 0.25
        %v392 = vadd.f32 %v381, 1e-08
        %v393 = vlog2.pop %v392
        %v394 = vmul.f32 %v393, 0.6931472
        %v395 = vsub.f32 0.0, %v394
        %v396 = vmul.f32 %v391, %v395
        %v397 = vsub.f32 %v396, %v389
        %v398 = vld [vmem:[%s331] sm:$0xff]
        %400 = vset.pattern.permute.xlu0 0
        %401 = vperm.xlu0 %400, %v398
        %v402 = vpop.permute.xlu0 %401
        %v404 = vperm.slane %v397, 0
        %v405 = vmul.f32 %v402, %v404
        %v406 = vadd.f32 %v405, 0.0
        %407 = vset.pattern.permute.xlu0 1
        %408 = vperm.xlu0 %407, %v398
        %v409 = vpop.permute.xlu0 %408
        %v411 = vperm.slane %v397, 1
        %v412 = vmul.f32 %v409, %v411
        %v413 = vadd.f32 %v406, %v412
        %414 = vset.pattern.permute.xlu0 2
        %415 = vperm.xlu0 %414, %v398
        %v416 = vpop.permute.xlu0 %415
        %v418 = vperm.slane %v397, 2
        %v419 = vmul.f32 %v416, %v418
        %v420 = vadd.f32 %v413, %v419
        %v421 = vld [vmem:[%s323] sm:$0x7f]
        %v422 = vld [vmem:[%s327] sm:$0xff]
        %424 = vset.pattern.permute.xlu0 0
        %425 = vperm.xlu0 %424, %v422
        %v426 = vpop.permute.xlu0 %425
        %v428 = vperm.slane %v421, 0
        %v429 = vsub.f32 %v426, %v428
        %v430 = vand.u32 2147483647, %v429
        %v431 = vadd.f32 %v430, 0.0
        %432 = vset.pattern.permute.xlu0 1
        %433 = vperm.xlu0 %432, %v422
        %v434 = vpop.permute.xlu0 %433
        %v436 = vperm.slane %v421, 1
        %v437 = vsub.f32 %v434, %v436
        %v438 = vand.u32 2147483647, %v437
        %v439 = vadd.f32 %v431, %v438
        %440 = vset.pattern.permute.xlu0 2
        %441 = vperm.xlu0 %440, %v422
        %v442 = vpop.permute.xlu0 %441
        %v444 = vperm.slane %v421, 2
        %v445 = vsub.f32 %v442, %v444
        %v446 = vand.u32 2147483647, %v445
        %v447 = vadd.f32 %v439, %v446
        %448 = vset.pattern.permute.xlu0 3
        %449 = vperm.xlu0 %448, %v422
        %v450 = vpop.permute.xlu0 %449
        %v452 = vperm.slane %v421, 3
        %v453 = vsub.f32 %v450, %v452
        %v454 = vand.u32 2147483647, %v453
        %v455 = vadd.f32 %v447, %v454
        %456 = vset.pattern.permute.xlu0 4
        %457 = vperm.xlu0 %456, %v422
        %v458 = vpop.permute.xlu0 %457
        %v460 = vperm.slane %v421, 4
        %v461 = vsub.f32 %v458, %v460
        %v462 = vand.u32 2147483647, %v461
        %v463 = vadd.f32 %v455, %v462
        %464 = vset.pattern.permute.xlu0 5
        %465 = vperm.xlu0 %464, %v422
        %v466 = vpop.permute.xlu0 %465
        %v468 = vperm.slane %v421, 5
        %v469 = vsub.f32 %v466, %v468
        %v470 = vand.u32 2147483647, %v469
        %v471 = vadd.f32 %v463, %v470
        %472 = vset.pattern.permute.xlu0 6
        %473 = vperm.xlu0 %472, %v422
        %v474 = vpop.permute.xlu0 %473
        %v476 = vperm.slane %v421, 6
        %v477 = vsub.f32 %v474, %v476
        %v478 = vand.u32 2147483647, %v477
        %v479 = vmul.f32 %v421, 0.5
        %v481 = vrot.slane %v479, 3
        %v483 = vsub.f32 %v421, %v481
        %vm484 = vcmp.ne.f32.partialorder %v483, %v483
        %v485 = vsel %vm484, 0.0, %v483
        %vm486 = vcmp.eq.f32.partialorder %v485, inf
        %v487 = vsel %vm486, 3.4028235e+38, %v485
        %vm488 = vcmp.eq.f32.partialorder %v487, -inf
        %v489 = vsel %vm488, -3.4028235e+38, %v487
        %v490 = vadd.f32 %v421, %v481
        %vm491 = vcmp.ne.f32.partialorder %v490, %v490
        %v492 = vsel %vm491, 0.0, %v490
        %vm493 = vcmp.eq.f32.partialorder %v492, inf
        %v494 = vsel %vm493, 3.4028235e+38, %v492
        %vm495 = vcmp.eq.f32.partialorder %v494, -inf
        %v496 = vsel %vm495, -3.4028235e+38, %v494
        %v497 = vmul.f32 %v422, 0.5
        %499 = vrot.lane.b32.xlu0 %v497, 125
        %v500 = vpop.permute.xlu0 %499
        %v502 = vsub.f32 %v422, %v500
        %vm503 = vcmp.ne.f32.partialorder %v502, %v502
        %v504 = vsel %vm503, 0.0, %v502
        %vm505 = vcmp.eq.f32.partialorder %v504, inf
        %v506 = vsel %vm505, 3.4028235e+38, %v504
        %vm507 = vcmp.eq.f32.partialorder %v506, -inf
        %v508 = vsel %vm507, -3.4028235e+38, %v506
        %v509 = vadd.f32 %v422, %v500
        %vm510 = vcmp.ne.f32.partialorder %v509, %v509
        %v511 = vsel %vm510, 0.0, %v509
        %vm512 = vcmp.eq.f32.partialorder %v511, inf
        %v513 = vsel %vm512, 3.4028235e+38, %v511
        %vm514 = vcmp.eq.f32.partialorder %v513, -inf
        %v515 = vsel %vm514, -3.4028235e+38, %v513
        %v516 = vperm.slane %v496, 0
        %518 = vset.pattern.permute.xlu0 0
        %519 = vperm.xlu0 %518, %v515
        %v520 = vpop.permute.xlu0 %519
        %v522 = vmin.f32 %v516, %v520
        %v523 = vperm.slane %v489, 0
        %525 = vset.pattern.permute.xlu0 0
        %526 = vperm.xlu0 %525, %v508
        %v527 = vpop.permute.xlu0 %526
        %v529 = vmax.f32 %v523, %v527
        %v530 = vsub.f32 %v522, %v529
        %v531 = vmax.f32 %v530, 0.0
        %v532 = vmax.f32 %v516, %v520
        %v533 = vmin.f32 %v523, %v527
        %v534 = vsub.f32 %v532, %v533
        %v535 = vmax.f32 %v534, 0.0
        %v536 = vsub.f32 %v496, %v489
        %v537 = vsub.f32 %v515, %v508
        %v538 = vperm.slane %v496, 1
        %539 = vset.pattern.permute.xlu0 1
        %540 = vperm.xlu0 %539, %v515
        %v541 = vpop.permute.xlu0 %540
        %v543 = vmin.f32 %v538, %v541
        %v544 = vperm.slane %v489, 1
        %545 = vset.pattern.permute.xlu0 1
        %546 = vperm.xlu0 %545, %v508
        %v547 = vpop.permute.xlu0 %546
        %v549 = vmax.f32 %v544, %v547
        %v550 = vsub.f32 %v543, %v549
        %v551 = vmax.f32 %v550, 0.0
        %v552 = vmul.f32 %v531, %v551
        %v553 = vmax.f32 %v538, %v541
        %v554 = vmin.f32 %v544, %v547
        %v555 = vsub.f32 %v553, %v554
        %v556 = vmax.f32 %v555, 0.0
        %v557 = vmul.f32 %v535, %v556
        %v559 = vrot.slane %v536, 1
        %v561 = vmul.f32 %v536, %v559
        %563 = vrot.lane.b32.xlu0 %v537, 127
        %v564 = vpop.permute.xlu0 %563
        %v566 = vmul.f32 %v537, %v564
        %v567 = vperm.slane %v496, 2
        %568 = vset.pattern.permute.xlu0 2
        %569 = vperm.xlu0 %568, %v515
        %v570 = vpop.permute.xlu0 %569
        %v572 = vmin.f32 %v567, %v570
        %v573 = vperm.slane %v489, 2
        %574 = vset.pattern.permute.xlu0 2
        %575 = vperm.xlu0 %574, %v508
        %v576 = vpop.permute.xlu0 %575
        %v578 = vmax.f32 %v573, %v576
        %v579 = vsub.f32 %v572, %v578
        %v580 = vmax.f32 %v579, 0.0
        %v581 = vmul.f32 %v552, %v580
        %v582 = vmax.f32 %v567, %v570
        %v583 = vmin.f32 %v573, %v576
        %v584 = vsub.f32 %v582, %v583
        %v585 = vmax.f32 %v584, 0.0
        %v586 = vmul.f32 %v557, %v585
        %v587 = vrot.slane %v536, 2
        %v589 = vmul.f32 %v561, %v587
        %590 = vrot.lane.b32.xlu0 %v537, 126
        %v591 = vpop.permute.xlu0 %590
        %v593 = vmul.f32 %v566, %v591
        %v594 = vperm.slane %v589, 0
        %596 = vset.pattern.permute.xlu0 0
        %597 = vperm.xlu0 %596, %v593
        %v598 = vpop.permute.xlu0 %597
        %v600 = vadd.f32 %v594, %v598
        %v601 = vsub.f32 %v600, %v581
        %v602 = vmax.f32 %v601, 1e-12
        %v603 = vrcp.pop %v602
        %v604 = vmul.f32 %v602, %v603
        %v605 = vsub.f32 2.0, %v604
        %v606 = vmul.f32 %v603, %v605
        %v607 = vmax.f32 %v586, 1e-12
        %v608 = vrcp.pop %v607
        %v609 = vmul.f32 %v607, %v608
        %v610 = vsub.f32 2.0, %v609
        %v611 = vmul.f32 %v608, %v610
        %v612 = vmul.f32 %v581, %v606
        %v613 = vsub.f32 %v612, 1.0
        %v614 = vmul.f32 %v601, %v611
        %v615 = vadd.f32 %v613, %v614
        %v616 = vsub.f32 0.0, %v615
        %v617 = vadd.f32 %v471, %v420
        %v618 = vadd.f32 %v617, %v616
        %v619 = vadd.f32 %v618, %v478
        %620 = vst [vmem:[%s303] sm:$0xff] %v619
        %s621 = sand.u32 %s177, 1
        %s622 = scalar_lea.sflag [#allocation3], %s621
        %s623 = sand.u32 %s177, 1
        %s624 = smul.addr %s623, 8
        %s625 = scalar_lea.vmem [#allocation2], %s624
        // Predicated region
        $region41: #{tpu_custom_call.1} parent=39 // pred_check
          %p626 = pneg %p187
        $region42: #{tpu_custom_call.1} parent=39 // pred_check_branch
          %628 = sbr.rel (%p626) target = $region44
        $region43: #{tpu_custom_call.1} parent=39 // pred_region
          %630 = vsyncadd %s622, 0
          %s631 = sadd.s32 %s24, %s23
          %s632 = smul.addr %s631, 8
          %s633 = scalar_lea.hbm %s5, %s632
          %s635 = sshll.u32 %s625, 4
          %s636 = int_to_ptr.vmem [resolvable:$true] %s635
          %s637 = sshll.u32 %s633, 4
          %s638 = int_to_ptr.hbm [resolvable:$true] %s637
          %640 = dma.vmem_to_hbm [thread:$0]  %s636, 128, %s638, %s622
        $region44: #{tpu_custom_call.1} parent=39 // pred_fallthru
          _
      $region40: #{tpu_custom_call.1} parent=5 // pred_fallthru
        _
      %p641 = scmp.le.s32.totalorder 2, %s14
      // Predicated region
      $region45: #{tpu_custom_call.1} parent=5 // pred_check
        %p642 = pneg %p641
      $region46: #{tpu_custom_call.1} parent=5 // pred_check_branch
        %644 = sbr.rel (%p642) target = $region48
      $region47: #{tpu_custom_call.1} parent=5 // pred_region
        %s645 = ssub.s32 %s14, 2
        // Predicated region
        $region49: #{tpu_custom_call.1} parent=47 // pred_check
          %p646 = pneg %p193
        $region50: #{tpu_custom_call.1} parent=47 // pred_check_branch
          %648 = sbr.rel (%p646) target = $region52
        $region51: #{tpu_custom_call.1} parent=47 // pred_region
          %s649 = sand.u32 %s178, 1
          %s650 = scalar_lea.sflag [#allocation3], %s649
          %s651 = sand.u32 %s178, 1
          %s652 = smul.addr %s651, 8
          %s653 = scalar_lea.vmem [#allocation2], %s652
          %655 = dma.done %s650, 128
        $region52: #{tpu_custom_call.1} parent=47 // pred_fallthru
          _
      $region48: #{tpu_custom_call.1} parent=5 // pred_fallthru
        _
    $region6: #{tpu_custom_call.1} parent=1 // loop_footer
      %s18 = sadd.s32 1, %s14
    $region7: #{tpu_custom_call.1} parent=1 // loop_footer_branch
      %13 = sbr.rel target = $region3
    $region8: #{tpu_custom_call.1} parent=1 // loop_exit
      _
    %656 = vsyncpa [#allocation3], 1
    %s657 = scalar_lea.sflag [#allocation3], 1
    %658 = vsyncpa %s657, 1

</llo_original>
